<compile_context>
chip_gen: v7x
topology: tpu7x:2x2x1
jax: 0.10.0
libtpu: 0.0.40
codegen_flags: <defaults>
</compile_context>

<pallas_src>
import jax
import jax.numpy as jnp
from jax.experimental import pallas as pl
from jax.experimental.pallas import tpu as pltpu


def ensemble_kernel(x_ref, w1_ref, w2_ref, o_ref):
    """Single-invocation fused ensemble MLP.

    x_ref:  (B, S, 2E+1)  pre-scaled premise|hypothesis|bias-channel input
    w1_ref: (2E+1, KHp)   all K first-layer weights + b1 row + const-1 column,
                          folded along lanes, zero-padded to KHp lanes (bf16)
    w2_ref: (KHp, C)      stacked second-layer weights (already / K) + b2-mean
                          row, zero-padded rows (bf16)
    o_ref:  (B, C)        ensemble-mean logits (f32, written once)
    """
    # Pooled input: wrapper pre-scaled by 1/SA, 1/SB, so a plain sum over the
    # sequence axis gives [mean_a | mean_b | 1] in one lane-dense reduction.
    x = jnp.sum(x_ref[...], axis=1)                               # (B, 2E+1) f32

    # Layer 1 for ALL K members at once (bias folded into the last W1 row).
    h = jnp.dot(x.astype(w1_ref.dtype), w1_ref[...],
                preferred_element_type=jnp.float32)               # (B, KHp) f32
    h = jnp.maximum(h, 0.0)                                       # f32 ReLU

    # Layer 2 + ensemble mean: h is [h_0 | ... | h_{K-1} | 1 | 0...] along
    # lanes, so h @ W2_aug == (1/K) * sum_k h_k @ W2_k + mean_k b2_k.
    o_ref[...] = jnp.dot(h.astype(w2_ref.dtype), w2_ref[...],
                         preferred_element_type=jnp.float32)      # (B, C)


def fold_ensemble_params(w1, b1, w2, b2, param_dtype=jnp.bfloat16):
    """One-time parameter folding (call at init, NOT per forward).

    w1: (K, 2E, H), b1: (K, 1, H), w2: (K, H, C), b2: (K, 1, C)
    Returns (w1_aug, w2_aug):
      w1_aug: (2E+1, KHp)  [e, k*H+h] = w1[k,e,h]; row 2E holds b1; column K*H
                            is a constant-1 unit (for the b2 bias row); padded.
      w2_aug: (KHp, C)     rows k*H+h = w2[k,h,c] / K; row K*H = mean_k b2_k.
    """
    K, twoE, H = w1.shape
    C = w2.shape[-1]
    KH = K * H
    KHp = ((KH + 1 + 127) // 128) * 128   # pad hidden lanes to full 128-lane vregs

    w1_flat = jnp.transpose(w1, (1, 0, 2)).reshape(twoE, KH)      # [e, k*H+h]
    b1_flat = b1.reshape(KH)

    w1_aug = jnp.zeros((twoE + 1, KHp), jnp.float32)
    w1_aug = w1_aug.at[:twoE, :KH].set(w1_flat)
    w1_aug = w1_aug.at[twoE, :KH].set(b1_flat)     # bias row (hit by the 1 in x)
    w1_aug = w1_aug.at[twoE, KH].set(1.0)          # constant-1 hidden unit

    w2_aug = jnp.zeros((KHp, C), jnp.float32)
    w2_aug = w2_aug.at[:KH, :].set(w2.reshape(KH, C) / K)          # 1/K absorbed
    w2_aug = w2_aug.at[KH, :].set(b2.reshape(K, C).sum(axis=0) / K)  # mean_k b2

    return w1_aug.astype(param_dtype), w2_aug.astype(param_dtype)


def _build_pooled_input(a, b):
    """Per-call input prep: (B,SA,E),(B,SB,E) -> (B, S, 2E+1), pre-scaled so a
    plain in-kernel sum over axis=1 yields [mean_a | mean_b | 1]."""
    B, SA, E = a.shape
    _, SB, _ = b.shape
    S = max(SA, SB)
    a = a * (1.0 / SA)
    b = b * (1.0 / SB)
    if SA < S:
        a = jnp.pad(a, ((0, 0), (0, S - SA), (0, 0)))
    if SB < S:
        b = jnp.pad(b, ((0, 0), (0, S - SB), (0, 0)))
    bias_ch = jnp.zeros((B, S, 1), a.dtype).at[:, 0, 0].set(1.0)   # sums to 1
    return jnp.concatenate([a, b, bias_ch], axis=-1)               # (B, S, 2E+1)


def ensemble_forward(a, b, w1_aug, w2_aug):
    """a: (B, SA, E), b: (B, SB, E); w1_aug/w2_aug from fold_ensemble_params."""
    x_in = _build_pooled_input(a, b)
    B = x_in.shape[0]
    C = w2_aug.shape[-1]

    # Single fused invocation, everything resident in VMEM (a few hundred KB at
    # these sizes): no grid loop, no per-step DMAs, output stored exactly once.
    # TODO(synk): at production sizes, (1) reintroduce a K-chunk grid axis with
    # an accumulator (out_spec constant over K, pl.when init/finalize,
    # dimension_semantics=('arbitrary',)), chunked so Kc*H is a multiple of 128
    # and resident weights stay < ~48 MiB on v7x (64 MiB phys / 32 MiB scoped;
    # v5e scoped default is only 16 MiB) with vmem_limit_bytes set explicitly,
    # and (2) add a leading 'parallel' grid axis over B tiles so v7x's second
    # TensorCore is used.
    return pl.pallas_call(
        ensemble_kernel,
        out_shape=jax.ShapeDtypeStruct((B, C), jnp.float32),
        in_specs=[pl.BlockSpec(memory_space=pltpu.MemorySpace.VMEM)] * 3,
        out_specs=pl.BlockSpec(memory_space=pltpu.MemorySpace.VMEM),
    )(x_in, w1_aug, w2_aug)


def ensemble_reference(a, b, w1, b1, w2, b2):
    """Pure-JAX f32 reference of the same forward pass (unfused weights)."""
    x = jnp.concatenate([a.mean(axis=1), b.mean(axis=1)], axis=-1)    # (B, 2E)
    h = jnp.maximum(jnp.einsum("be,keh->kbh", x, w1) + b1, 0.0)       # (K, B, H)
    y = jnp.einsum("kbh,khc->kbc", h, w2) + b2                        # (K, B, C)
    return y.mean(axis=0)                                             # (B, C)


if __name__ == "__main__":
    # Small, deterministic problem sizes implied by the module's forward():
    # a: batch x seqlenA x embedding, b: batch x seqlenB x embedding.
    B, SA, SB, E, H, C, K = 2, 8, 8, 32, 32, 4, 10

    key = jax.random.PRNGKey(0)
    ka, kb, kw1, kb1, kw2, kb2 = jax.random.split(key, 6)

    a = jax.random.normal(ka, (B, SA, E), dtype=jnp.float32)
    b = jax.random.normal(kb, (B, SB, E), dtype=jnp.float32)

    # Deterministic per-member parameters (K independent models, stacked on axis 0).
    w1 = jax.random.normal(kw1, (K, 2 * E, H), dtype=jnp.float32) * 0.1
    b1 = jax.random.normal(kb1, (K, 1, H), dtype=jnp.float32) * 0.1
    w2 = jax.random.normal(kw2, (K, H, C), dtype=jnp.float32) * 0.1
    b2 = jax.random.normal(kb2, (K, 1, C), dtype=jnp.float32) * 0.1

    # One-time fold at "init" time (bf16 weights; MXU-native, f32 accumulation).
    w1_aug, w2_aug = fold_ensemble_params(w1, b1, w2, b2, param_dtype=jnp.bfloat16)

    forward = jax.jit(ensemble_forward)
    y = jax.block_until_ready(forward(a, b, w1_aug, w2_aug))
    y_ref = ensemble_reference(a, b, w1, b1, w2, b2)

    assert y.shape == (B, C)
    # bf16 matmul operands with f32 accumulation: loosen tolerance vs pure f32.
    assert jnp.allclose(y, y_ref, atol=2e-2, rtol=2e-2), (y, y_ref)

    # TODO(synk): `Ensemble.loss` (masked CrossEntropyLoss over 'classes') is not
    # part of the forward hot path and is left to plain JAX if needed.
    print("KERNEL_OK")
</pallas_src>

<mosaic_0001>
module attributes {stable_mosaic.version = 11 : i64} {
  func.func @ensemble_kernel(%arg0: memref<2x8x65xf32, #tpu.memory_space<vmem>>, %arg1: memref<65x384xbf16, #tpu.memory_space<vmem>>, %arg2: memref<384x4xbf16, #tpu.memory_space<vmem>>, %arg3: memref<2x4xf32, #tpu.memory_space<vmem>>) attributes {dimension_semantics = [], scalar_prefetch = 0 : i64, scratch_operands = 0 : i64, tpu.core_type = #tpu.core_type<tc>} {
    %c0 = arith.constant 0 : index
    %c0_0 = arith.constant 0 : index
    %c0_1 = arith.constant 0 : index
    %0 = vector.load %arg0[%c0, %c0_0, %c0_1] : memref<2x8x65xf32, #tpu.memory_space<vmem>>, vector<2x8x65xf32>
    %cst = arith.constant dense<0.000000e+00> : vector<2x65xf32>
    %1 = vector.multi_reduction <add>, %0, %cst [1] : vector<2x8x65xf32> to vector<2x65xf32>
    %2 = arith.truncf %1 : vector<2x65xf32> to vector<2x65xbf16>
    %c0_2 = arith.constant 0 : index
    %c0_3 = arith.constant 0 : index
    %3 = vector.load %arg1[%c0_2, %c0_3] : memref<65x384xbf16, #tpu.memory_space<vmem>>, vector<65x384xbf16>
    %cst_4 = arith.constant dense<0.000000e+00> : vector<2x384xf32>
    %4 = tpu.matmul %2, %3, %cst_4 {dimension_numbers = #tpu.dot_dimension_numbers<[1], [0], [0], [1], [0, 0, 1, 1], [], []>} : vector<2x65xbf16>, vector<65x384xbf16>, vector<2x384xf32> -> vector<2x384xf32>
    %cst_5 = arith.constant 0.000000e+00 : f32
    %5 = vector.broadcast %cst_5 : f32 to vector<2x384xf32>
    %6 = arith.maximumf %4, %5 : vector<2x384xf32>
    %7 = arith.truncf %6 : vector<2x384xf32> to vector<2x384xbf16>
    %c0_6 = arith.constant 0 : index
    %c0_7 = arith.constant 0 : index
    %8 = vector.load %arg2[%c0_6, %c0_7] : memref<384x4xbf16, #tpu.memory_space<vmem>>, vector<384x4xbf16>
    %cst_8 = arith.constant dense<0.000000e+00> : vector<2x4xf32>
    %9 = tpu.matmul %7, %8, %cst_8 {dimension_numbers = #tpu.dot_dimension_numbers<[1], [0], [0], [1], [0, 0, 1, 1], [], []>} : vector<2x384xbf16>, vector<384x4xbf16>, vector<2x4xf32> -> vector<2x4xf32>
    %c0_9 = arith.constant 0 : index
    %c0_10 = arith.constant 0 : index
    %10 = vector.load %arg3[%c0_9, %c0_10] : memref<2x4xf32, #tpu.memory_space<vmem>>, vector<2x4xf32>
    tpu.vector_store %arg3[%c0_9, %c0_10], %9 {strides = array<i32>} : memref<2x4xf32, #tpu.memory_space<vmem>>, vector<2x4xf32>,
    return
  }
}

</mosaic_0001>

<llo_original>
// kernel: ensemble_forward.1
$region0: #{ensemble_forward.1}
  #allocation0 [shape = 'u32[]', space=smem, size = 0x4, offset = 0x4, fixed_abs, tag = 'smem constant byte address 0x4 - core index']
  #allocation1 [shape = 'u32[144,128]{1,0:T(1,128)}', space=vmem, size = 0x12000, scoped, tag = 'internal scratch']
  %s0 = inlined_call_operand.vmem [shape: f32[2,8,65], index: 0, kind: input, shape index: {}]
  %s1 = inlined_call_operand.vmem [shape: bf16[65,384], index: 1, kind: input, shape index: {}]
  %s2 = inlined_call_operand.vmem [shape: bf16[384,4], index: 2, kind: input, shape index: {}]
  %s3 = inlined_call_operand.hbm [shape: f32[2,4], index: 3, kind: output, shape index: {}]
  %s4 = sld [smem:[#allocation0]]
  $region22: #{ensemble_forward.1} parent=0
    _
  %s6 = ssub.s32 1, %s4
  %s7 = scalar_select 0, %s6, %s4
  $region1: #{ensemble_forward.1} parent=0
    #allocation2 [shape = 'u8[1024]{0}', space=vmem, size = 0x400, scoped, tag = 'output window, operand 0, single buffered']
    #allocation3 [shape = 's32[1]{0}', space=sflag, size = 0x4, scoped, tag = 'scoped memory for ensemble_forward.1']
    %8 = vsyncpa [#allocation3], 0
    // Predicated region
    $region2: #{ensemble_forward.1} parent=1 // pred_check
      _
    $region3: #{ensemble_forward.1} parent=1 // pred_check_branch
      %10 = sbr.rel (0) target = $region5
    $region4: #{ensemble_forward.1} parent=1 // pred_region
      _
    $region5: #{ensemble_forward.1} parent=1 // pred_fallthru
      _
    // Predicated region
    $region6: #{ensemble_forward.1} parent=1 // pred_check
      _
    $region7: #{ensemble_forward.1} parent=1 // pred_check_branch
      %12 = sbr.rel (0) target = $region9
    $region8: #{ensemble_forward.1} parent=1 // pred_region
      _
    $region9: #{ensemble_forward.1} parent=1 // pred_fallthru
      _
    // Predicated region
    $region10: #{ensemble_forward.1} parent=1 // pred_check
      _
    $region11: #{ensemble_forward.1} parent=1 // pred_check_branch
      %14 = sbr.rel (0) target = $region13
    $region12: #{ensemble_forward.1} parent=1 // pred_region
      _
    $region13: #{ensemble_forward.1} parent=1 // pred_fallthru
      _
    %v16 = vld [vmem:[%s0] sm:$0xff]
    %v17 = vld [vmem:[%s0 + $0x8] sm:$0xff]
    %vm18 = vcmask 531456
    %v19 = vsel %vm18, %v16, 0.0
    %v20 = vrot.slane %v19, 4
    %v21 = vadd.f32 %v19, %v20
    %v22 = vrot.slane %v21, 2
    %v23 = vadd.f32 %v21, %v22
    %v24 = vrot.slane %v23, 1
    %v25 = vadd.f32 %v23, %v24
    %v26 = vsel %vm18, %v17, 0.0
    %v27 = vrot.slane %v26, 4
    %v28 = vadd.f32 %v26, %v27
    %v29 = vrot.slane %v28, 2
    %v30 = vadd.f32 %v28, %v29
    %v31 = vrot.slane %v30, 1
    %v32 = vadd.f32 %v30, %v31
    %v33 = vpack.c.bf16 %v25, %v25
    %v34 = vpack.c.bf16 %v32, %v32
    %v35 = vld [vmem:[%s1] sm:$0xff]
    %v36 = vld [vmem:[%s1 + $0x8] sm:$0xf]
    %v37 = vld [vmem:[%s1 + $0xc] sm:$0xff]
    %v38 = vld [vmem:[%s1 + $0x14] sm:$0xf]
    %v39 = vld [vmem:[%s1 + $0x18] sm:$0xff]
    %v40 = vld [vmem:[%s1 + $0x20] sm:$0xf]
    %v41 = vld [vmem:[%s1 + $0x24] sm:$0xff]
    %v42 = vld [vmem:[%s1 + $0x2c] sm:$0xf]
    %v43 = vld [vmem:[%s1 + $0x30] sm:$0xff]
    %v44 = vld [vmem:[%s1 + $0x38] sm:$0xf]
    %v45 = vld [vmem:[%s1 + $0x3c] sm:$0xff]
    %v46 = vld [vmem:[%s1 + $0x44] sm:$0xf]
    %v47 = vld [vmem:[%s1 + $0x48] sm:$0xff]
    %v48 = vld [vmem:[%s1 + $0x50] sm:$0xf]
    %v49 = vld [vmem:[%s1 + $0x54] sm:$0xff]
    %v50 = vld [vmem:[%s1 + $0x5c] sm:$0xf]
    %v51 = vld [vmem:[%s1 + $0x60] sm:$0x11]
    %v52 = vld [vmem:[%s1 + $0x68] sm:$0x1]
    %v55 = vunpack.c.l.b16 %v33
    %v56 = vunpack.c.l.b16 %v34
    %vm57 = vcmask 1041409
    %v58 = vsel %vm57, %v56, %v55
    %v59 = vpack.c.b16 %v58, %v58
    %v78 = vunpack.c.l.b16 %v35
    %v79 = vunpack.c.h.b16 %v35
    %v80 = vunpack.c.l.b16 %v36
    %v81 = vunpack.c.l.b16 %v37
    %v82 = vunpack.c.h.b16 %v37
    %v83 = vunpack.c.l.b16 %v38
    %v84 = vunpack.c.l.b16 %v39
    %v85 = vunpack.c.h.b16 %v39
    %v86 = vunpack.c.l.b16 %v40
    %v87 = vunpack.c.l.b16 %v41
    %v88 = vunpack.c.h.b16 %v41
    %v89 = vunpack.c.l.b16 %v42
    %v90 = vunpack.c.l.b16 %v43
    %v91 = vunpack.c.h.b16 %v43
    %v92 = vunpack.c.l.b16 %v44
    %v93 = vunpack.c.l.b16 %v45
    %v94 = vunpack.c.h.b16 %v45
    %v95 = vunpack.c.l.b16 %v46
    %v96 = vunpack.c.l.b16 %v47
    %v97 = vunpack.c.h.b16 %v47
    %v98 = vunpack.c.l.b16 %v48
    %v99 = vunpack.c.l.b16 %v49
    %v100 = vunpack.c.h.b16 %v49
    %v101 = vunpack.c.l.b16 %v50
    %v102 = vunpack.c.l.b16 %v51
    %v103 = vunpack.c.h.b16 %v51
    %v104 = vunpack.c.l.b16 %v52
    %v105 = vpack.c.b16 %v81, %v78
    %v106 = vpack.c.b16 %v82, %v79
    %v107 = vpack.c.b16 %v83, %v80
    %v108 = vpack.c.b16 %v87, %v84
    %v109 = vpack.c.b16 %v88, %v85
    %v110 = vpack.c.b16 %v89, %v86
    %v111 = vpack.c.b16 %v93, %v90
    %v112 = vpack.c.b16 %v94, %v91
    %v113 = vpack.c.b16 %v95, %v92
    %v114 = vpack.c.b16 %v99, %v96
    %v115 = vpack.c.b16 %v100, %v97
    %v116 = vpack.c.b16 %v101, %v98
    %v117 = vpack.c.b16 %v102, %v102
    %v118 = vpack.c.b16 %v103, %v103
    %v119 = vpack.c.b16 %v104, %v104
    %v133 = vsel %vm18, %v59, 0
    %vm135 = vcmask 1040384
    %v136 = vsel 0, 4294967295, 65535
    %v137 = vsel %vm135, %v136, 0
    %v139 = vand.u32 %v117, %v137
    %v142 = vand.u32 %v118, %v137
    %v145 = vand.u32 %v119, %v137
    %147 = vmatprep.subr.bf16.mxu0 %v106
    %148 = vmatpush1.bf16.msra.mxu0 %v105
    %149 = vmatprep.subr.bf16.mxu0 %v109
    %150 = vmatpush1.bf16.msra.mxu0 %v108
    %151 = vmatprep.subr.bf16.mxu0 %v112
    %152 = vmatpush1.bf16.msra.mxu0 %v111
    %153 = vmatprep.subr.bf16.mxu0 %v115
    %154 = vmatpush1.bf16.msra.mxu0 %v114
    %155 = vmatprep.subr.bf16.mxu0 %v142
    %156 = vmatpush1.bf16.msra.mxu0 %v139
    %157 = vmatprep.subr.bf16.mxu0 0
    %158 = vmatpush1.bf16.msra.mxu0 0
    %159 = vmatprep.subr.bf16.mxu0 0
    %160 = vmatpush1.bf16.msra.mxu0 0
    %161 = vmatprep.subr.bf16.mxu0 0
    %162 = vmatpush1.bf16.msra.mxu0 0
    %163 = vmatprep.subr.bf16.mxu0 0
    %164 = vmatpush1.bf16.msra.mxu0 0
    %165 = vmatprep.subr.bf16.mxu0 0
    %166 = vmatpush1.bf16.msra.mxu0 0
    %167 = vmatprep.subr.bf16.mxu0 0
    %168 = vmatpush1.bf16.msra.mxu0 0
    %169 = vmatprep.subr.bf16.mxu0 0
    %170 = vmatpush1.bf16.msra.mxu0 0
    %171 = vmatprep.subr.bf16.mxu0 0
    %172 = vmatpush1.bf16.msra.mxu0 0
    %173 = vmatprep.subr.bf16.mxu0 0
    %174 = vmatpush1.bf16.msra.mxu0 0
    %175 = vmatprep.subr.bf16.mxu0 0
    %176 = vmatpush1.bf16.msra.mxu0 0
    %177 = vmatprep.subr.bf16.mxu0 0
    %178 = vmatpush1.bf16.msra.mxu0 0
    %179 = vmatprep.mubr.bf16.mxu0 0
    %180 = vmatmul.mubr.bf16.gmra.mrb[0].mxu0 %v133
    %v181 = vpop.f32.mrb[0].mxu0
    %v182 = vadd.f32 0.0, %v181
    %v183 = vpop.f32.mrb[0].mxu0
    %v184 = vadd.f32 0.0, %v183
    %v185 = vpop.f32.mrb[0].mxu0
    %v186 = vpop.f32.mrb[0].mxu0
    %187 = vdwg.mxu0
    %188 = vmatprep.subr.bf16.mxu0 0
    %189 = vmatpush1.bf16.msra.mxu0 %v107
    %190 = vmatprep.subr.bf16.mxu0 0
    %191 = vmatpush1.bf16.msra.mxu0 %v110
    %192 = vmatprep.subr.bf16.mxu0 0
    %193 = vmatpush1.bf16.msra.mxu0 %v113
    %194 = vmatprep.subr.bf16.mxu0 0
    %195 = vmatpush1.bf16.msra.mxu0 %v116
    %196 = vmatprep.subr.bf16.mxu0 0
    %197 = vmatpush1.bf16.msra.mxu0 %v145
    %198 = vmatprep.subr.bf16.mxu0 0
    %199 = vmatpush1.bf16.msra.mxu0 0
    %200 = vmatprep.subr.bf16.mxu0 0
    %201 = vmatpush1.bf16.msra.mxu0 0
    %202 = vmatprep.subr.bf16.mxu0 0
    %203 = vmatpush1.bf16.msra.mxu0 0
    %204 = vmatprep.subr.bf16.mxu0 0
    %205 = vmatpush1.bf16.msra.mxu0 0
    %206 = vmatprep.subr.bf16.mxu0 0
    %207 = vmatpush1.bf16.msra.mxu0 0
    %208 = vmatprep.subr.bf16.mxu0 0
    %209 = vmatpush1.bf16.msra.mxu0 0
    %210 = vmatprep.subr.bf16.mxu0 0
    %211 = vmatpush1.bf16.msra.mxu0 0
    %212 = vmatprep.subr.bf16.mxu0 0
    %213 = vmatpush1.bf16.msra.mxu0 0
    %214 = vmatprep.subr.bf16.mxu0 0
    %215 = vmatpush1.bf16.msra.mxu0 0
    %216 = vmatprep.subr.bf16.mxu0 0
    %217 = vmatpush1.bf16.msra.mxu0 0
    %218 = vmatprep.subr.bf16.mxu0 0
    %219 = vmatpush1.bf16.msra.mxu0 0
    %220 = vmatprep.mubr.bf16.mxu0 0
    %221 = vmatmul.mubr.bf16.gmra.mrb[0].mxu0 %v133
    %v222 = vpop.f32.mrb[0].mxu0
    %v223 = vadd.f32 0.0, %v222
    %v224 = vpop.f32.mrb[0].mxu0
    %v225 = vpop.f32.mrb[0].mxu0
    %v226 = vpop.f32.mrb[0].mxu0
    %227 = vdwg.mxu0
    %v228 = vmax.f32 %v182, 0.0
    %v229 = vmax.f32 %v184, 0.0
    %v230 = vmax.f32 %v223, 0.0
    %v231 = vpack.c.bf16 %v228, %v228
    %v232 = vpack.c.bf16 %v229, %v229
    %v233 = vpack.c.bf16 %v230, %v230
    %v234 = vld [vmem:[%s2] sm:$0xf]
    %v235 = vld [vmem:[%s2 + $0x4] sm:$0xf]
    %v236 = vld [vmem:[%s2 + $0x8] sm:$0xf]
    %v237 = vld [vmem:[%s2 + $0xc] sm:$0xf]
    %v238 = vld [vmem:[%s2 + $0x10] sm:$0xf]
    %v239 = vld [vmem:[%s2 + $0x14] sm:$0xf]
    %v240 = vld [vmem:[%s2 + $0x18] sm:$0xf]
    %v241 = vld [vmem:[%s2 + $0x1c] sm:$0xf]
    %v242 = vld [vmem:[%s2 + $0x20] sm:$0xf]
    %v243 = vld [vmem:[%s2 + $0x24] sm:$0xf]
    %v244 = vld [vmem:[%s2 + $0x28] sm:$0xf]
    %v245 = vld [vmem:[%s2 + $0x2c] sm:$0xf]
    %v246 = vld [vmem:[%s2 + $0x30] sm:$0xf]
    %v247 = vld [vmem:[%s2 + $0x34] sm:$0xf]
    %v248 = vld [vmem:[%s2 + $0x38] sm:$0xf]
    %v249 = vld [vmem:[%s2 + $0x3c] sm:$0xf]
    %v250 = vld [vmem:[%s2 + $0x40] sm:$0xf]
    %v251 = vld [vmem:[%s2 + $0x44] sm:$0xf]
    %v252 = vld [vmem:[%s2 + $0x48] sm:$0xf]
    %v253 = vld [vmem:[%s2 + $0x4c] sm:$0xf]
    %v254 = vld [vmem:[%s2 + $0x50] sm:$0xf]
    %v255 = vld [vmem:[%s2 + $0x54] sm:$0xf]
    %v256 = vld [vmem:[%s2 + $0x58] sm:$0xf]
    %v257 = vld [vmem:[%s2 + $0x5c] sm:$0xf]
    %v258 = vld [vmem:[%s2 + $0x60] sm:$0xf]
    %v259 = vld [vmem:[%s2 + $0x64] sm:$0xf]
    %v260 = vld [vmem:[%s2 + $0x68] sm:$0xf]
    %v261 = vld [vmem:[%s2 + $0x6c] sm:$0xf]
    %v262 = vld [vmem:[%s2 + $0x70] sm:$0xf]
    %v263 = vld [vmem:[%s2 + $0x74] sm:$0xf]
    %v264 = vld [vmem:[%s2 + $0x78] sm:$0xf]
    %v265 = vld [vmem:[%s2 + $0x7c] sm:$0xf]
    %v266 = vld [vmem:[%s2 + $0x80] sm:$0xf]
    %v267 = vld [vmem:[%s2 + $0x84] sm:$0xf]
    %v268 = vld [vmem:[%s2 + $0x88] sm:$0xf]
    %v269 = vld [vmem:[%s2 + $0x8c] sm:$0xf]
    %v270 = vld [vmem:[%s2 + $0x90] sm:$0xf]
    %v271 = vld [vmem:[%s2 + $0x94] sm:$0xf]
    %v272 = vld [vmem:[%s2 + $0x98] sm:$0xf]
    %v273 = vld [vmem:[%s2 + $0x9c] sm:$0xf]
    %v274 = vld [vmem:[%s2 + $0xa0] sm:$0xf]
    %v275 = vld [vmem:[%s2 + $0xa4] sm:$0xf]
    %v276 = vld [vmem:[%s2 + $0xa8] sm:$0xf]
    %v277 = vld [vmem:[%s2 + $0xac] sm:$0xf]
    %v278 = vld [vmem:[%s2 + $0xb0] sm:$0xf]
    %v279 = vld [vmem:[%s2 + $0xb4] sm:$0xf]
    %v280 = vld [vmem:[%s2 + $0xb8] sm:$0xf]
    %v281 = vld [vmem:[%s2 + $0xbc] sm:$0xf]
    %v330 = vunpack.c.l.b16 %v234
    %v331 = vunpack.c.l.b16 %v235
    %v332 = vunpack.c.l.b16 %v236
    %v333 = vunpack.c.l.b16 %v237
    %v334 = vunpack.c.l.b16 %v238
    %v335 = vunpack.c.l.b16 %v239
    %v336 = vunpack.c.l.b16 %v240
    %v337 = vunpack.c.l.b16 %v241
    %v338 = vunpack.c.l.b16 %v242
    %v339 = vunpack.c.l.b16 %v243
    %v340 = vunpack.c.l.b16 %v244
    %v341 = vunpack.c.l.b16 %v245
    %v342 = vunpack.c.l.b16 %v246
    %v343 = vunpack.c.l.b16 %v247
    %v344 = vunpack.c.l.b16 %v248
    %v345 = vunpack.c.l.b16 %v249
    %v346 = vunpack.c.l.b16 %v250
    %v347 = vunpack.c.l.b16 %v251
    %v348 = vunpack.c.l.b16 %v252
    %v349 = vunpack.c.l.b16 %v253
    %v350 = vunpack.c.l.b16 %v254
    %v351 = vunpack.c.l.b16 %v255
    %v352 = vunpack.c.l.b16 %v256
    %v353 = vunpack.c.l.b16 %v257
    %v354 = vunpack.c.l.b16 %v258
    %v355 = vunpack.c.l.b16 %v259
    %v356 = vunpack.c.l.b16 %v260
    %v357 = vunpack.c.l.b16 %v261
    %v358 = vunpack.c.l.b16 %v262
    %v359 = vunpack.c.l.b16 %v263
    %v360 = vunpack.c.l.b16 %v264
    %v361 = vunpack.c.l.b16 %v265
    %v362 = vunpack.c.l.b16 %v266
    %v363 = vunpack.c.l.b16 %v267
    %v364 = vunpack.c.l.b16 %v268
    %v365 = vunpack.c.l.b16 %v269
    %v366 = vunpack.c.l.b16 %v270
    %v367 = vunpack.c.l.b16 %v271
    %v368 = vunpack.c.l.b16 %v272
    %v369 = vunpack.c.l.b16 %v273
    %v370 = vunpack.c.l.b16 %v274
    %v371 = vunpack.c.l.b16 %v275
    %v372 = vunpack.c.l.b16 %v276
    %v373 = vunpack.c.l.b16 %v277
    %v374 = vunpack.c.l.b16 %v278
    %v375 = vunpack.c.l.b16 %v279
    %v376 = vunpack.c.l.b16 %v280
    %v377 = vunpack.c.l.b16 %v281
    %v378 = vpack.c.b16 %v331, %v330
    %v379 = vpack.c.b16 %v333, %v332
    %v380 = vpack.c.b16 %v335, %v334
    %v381 = vpack.c.b16 %v337, %v336
    %v382 = vpack.c.b16 %v339, %v338
    %v383 = vpack.c.b16 %v341, %v340
    %v384 = vpack.c.b16 %v343, %v342
    %v385 = vpack.c.b16 %v345, %v344
    %v386 = vpack.c.b16 %v347, %v346
    %v387 = vpack.c.b16 %v349, %v348
    %v388 = vpack.c.b16 %v351, %v350
    %v389 = vpack.c.b16 %v353, %v352
    %v390 = vpack.c.b16 %v355, %v354
    %v391 = vpack.c.b16 %v357, %v356
    %v392 = vpack.c.b16 %v359, %v358
    %v393 = vpack.c.b16 %v361, %v360
    %v394 = vpack.c.b16 %v363, %v362
    %v395 = vpack.c.b16 %v365, %v364
    %v396 = vpack.c.b16 %v367, %v366
    %v397 = vpack.c.b16 %v369, %v368
    %v398 = vpack.c.b16 %v371, %v370
    %v399 = vpack.c.b16 %v373, %v372
    %v400 = vpack.c.b16 %v375, %v374
    %v401 = vpack.c.b16 %v377, %v376
    %426 = vmatprep.subr.bf16.mxu0 0
    %427 = vmatpush1.bf16.msra.mxu0 %v378
    %428 = vmatprep.subr.bf16.mxu0 0
    %429 = vmatpush1.bf16.msra.mxu0 %v379
    %430 = vmatprep.subr.bf16.mxu0 0
    %431 = vmatpush1.bf16.msra.mxu0 %v380
    %432 = vmatprep.subr.bf16.mxu0 0
    %433 = vmatpush1.bf16.msra.mxu0 %v381
    %434 = vmatprep.subr.bf16.mxu0 0
    %435 = vmatpush1.bf16.msra.mxu0 %v382
    %436 = vmatprep.subr.bf16.mxu0 0
    %437 = vmatpush1.bf16.msra.mxu0 %v383
    %438 = vmatprep.subr.bf16.mxu0 0
    %439 = vmatpush1.bf16.msra.mxu0 %v384
    %440 = vmatprep.subr.bf16.mxu0 0
    %441 = vmatpush1.bf16.msra.mxu0 %v385
    %442 = vmatprep.subr.bf16.mxu0 0
    %443 = vmatpush1.bf16.msra.mxu0 %v386
    %444 = vmatprep.subr.bf16.mxu0 0
    %445 = vmatpush1.bf16.msra.mxu0 %v387
    %446 = vmatprep.subr.bf16.mxu0 0
    %447 = vmatpush1.bf16.msra.mxu0 %v388
    %448 = vmatprep.subr.bf16.mxu0 0
    %449 = vmatpush1.bf16.msra.mxu0 %v389
    %450 = vmatprep.subr.bf16.mxu0 0
    %451 = vmatpush1.bf16.msra.mxu0 %v390
    %452 = vmatprep.subr.bf16.mxu0 0
    %453 = vmatpush1.bf16.msra.mxu0 %v391
    %454 = vmatprep.subr.bf16.mxu0 0
    %455 = vmatpush1.bf16.msra.mxu0 %v392
    %456 = vmatprep.subr.bf16.mxu0 0
    %457 = vmatpush1.bf16.msra.mxu0 %v393
    %458 = vmatprep.mubr.bf16.mxu0 %v232
    %459 = vmatmul.mubr.bf16.gmra.mrb[0].mxu0 %v231
    %v460 = vpop.f32.mrb[0].mxu0
    %v461 = vadd.f32 0.0, %v460
    %v462 = vpop.f32.mrb[0].mxu0
    %v463 = vpop.f32.mrb[0].mxu0
    %v464 = vpop.f32.mrb[0].mxu0
    %465 = vdwg.mxu0
    %466 = vmatprep.subr.bf16.mxu0 0
    %467 = vmatpush1.bf16.msra.mxu0 %v394
    %468 = vmatprep.subr.bf16.mxu0 0
    %469 = vmatpush1.bf16.msra.mxu0 %v395
    %470 = vmatprep.subr.bf16.mxu0 0
    %471 = vmatpush1.bf16.msra.mxu0 %v396
    %472 = vmatprep.subr.bf16.mxu0 0
    %473 = vmatpush1.bf16.msra.mxu0 %v397
    %474 = vmatprep.subr.bf16.mxu0 0
    %475 = vmatpush1.bf16.msra.mxu0 %v398
    %476 = vmatprep.subr.bf16.mxu0 0
    %477 = vmatpush1.bf16.msra.mxu0 %v399
    %478 = vmatprep.subr.bf16.mxu0 0
    %479 = vmatpush1.bf16.msra.mxu0 %v400
    %480 = vmatprep.subr.bf16.mxu0 0
    %481 = vmatpush1.bf16.msra.mxu0 %v401
    %482 = vmatprep.subr.bf16.mxu0 0
    %483 = vmatpush1.bf16.msra.mxu0 0
    %484 = vmatprep.subr.bf16.mxu0 0
    %485 = vmatpush1.bf16.msra.mxu0 0
    %486 = vmatprep.subr.bf16.mxu0 0
    %487 = vmatpush1.bf16.msra.mxu0 0
    %488 = vmatprep.subr.bf16.mxu0 0
    %489 = vmatpush1.bf16.msra.mxu0 0
    %490 = vmatprep.subr.bf16.mxu0 0
    %491 = vmatpush1.bf16.msra.mxu0 0
    %492 = vmatprep.subr.bf16.mxu0 0
    %493 = vmatpush1.bf16.msra.mxu0 0
    %494 = vmatprep.subr.bf16.mxu0 0
    %495 = vmatpush1.bf16.msra.mxu0 0
    %496 = vmatprep.subr.bf16.mxu0 0
    %497 = vmatpush1.bf16.msra.mxu0 0
    %498 = vmatprep.mubr.bf16.mxu0 0
    %499 = vmatmul.mubr.bf16.gmra.mrb[0].mxu0 %v233
    %v500 = vpop.f32.mrb[0].mxu0
    %v501 = vadd.f32 %v461, %v500
    %v502 = vpop.f32.mrb[0].mxu0
    %v503 = vpop.f32.mrb[0].mxu0
    %v504 = vpop.f32.mrb[0].mxu0
    %505 = vdwg.mxu0
    %vm506 = vcmask 25600
    %507 = vst.msk [vmem:[#allocation2] sm:$0x3] %vm506, %v501
    // Predicated region
    $region14: #{ensemble_forward.1} parent=1 // pred_check
      _
    $region15: #{ensemble_forward.1} parent=1 // pred_check_branch
      %509 = sbr.rel (0) target = $region17
    $region16: #{ensemble_forward.1} parent=1 // pred_region
      %s511 = ssub.s32 32, 32
      %512 = vsyncadd [#allocation3], %s511
      %s514 = sshll.u32 [#allocation2], 4
      %s515 = int_to_ptr.vmem [resolvable:$true] %s514
      %517 = dma.vmem_to_hbm [thread:$0]  %s515, 32, %s3, [#allocation3]
    $region17: #{ensemble_forward.1} parent=1 // pred_fallthru
      _
    // Predicated region
    $region18: #{ensemble_forward.1} parent=1 // pred_check
      _
    $region19: #{ensemble_forward.1} parent=1 // pred_check_branch
      %519 = sbr.rel (0) target = $region21
    $region20: #{ensemble_forward.1} parent=1 // pred_region
      %520 = dma.done [#allocation3], 32
    $region21: #{ensemble_forward.1} parent=1 // pred_fallthru
      _
    %521 = vsyncpa [#allocation3], 1

</llo_original>
